<compile_context>
chip_gen: v5e
topology: v5e:2x2
jax: 0.10.0
libtpu: 0.0.40
codegen_flags: <defaults>
</compile_context>

<pallas_src>
import functools

import jax
import jax.numpy as jnp
from jax import lax
from jax.experimental import pallas as pl
from jax.experimental.pallas import tpu as pltpu

EPS = 1e-5  # PyTorch InstanceNorm2d default eps


# ----------------------------------------------------------------------------- kernels
def _conv_tile(x_ref, w_ref):
    """Stride-2 2x2 (grouped) conv on one spatial tile as two MXU matmuls.

    x_ref: (1, th, 2, W2, K) block, K = 2*Cin, feature f = kw*Cin + cin.
    w_ref: (2, ct, K) block (kh-split dense weight; the grouped structure is
           baked into zeros of the dense matrix).
    Returns y: (ct, th*W2) f32 -- channel-major, spatial on the lane dim.
    """
    _, th, _, W2, K = x_ref.shape
    st = th * W2
    # Even (kh=0) / odd (kh=1) input rows as (st, K) matmul operands.  The bf16
    # cast is a no-op when the wrapper already fed bf16 (NCHW path).
    x_top = x_ref[0, :, 0, :, :].astype(jnp.bfloat16).reshape(st, K)
    x_bot = x_ref[0, :, 1, :, :].astype(jnp.bfloat16).reshape(st, K)
    dn = (((1,), (1,)), ((), ()))  # contract K of lhs with K of rhs (A @ B^T)
    y = lax.dot_general(w_ref[0], x_top, dn, preferred_element_type=jnp.float32)
    y = y + lax.dot_general(w_ref[1], x_bot, dn, preferred_element_type=jnp.float32)
    # TODO(synk): fuse into one dot_general contracting over (kh, K) (2x MXU
    # depth, drops the f32 add) once multi-contracting-dim dot_general lowering
    # is confirmed on Mosaic for these operand ranks.
    return y


def _norm_act(y, g_ref, b_ref, mean, var):
    """InstanceNorm affine + SiLU on a (ct, st) f32 tile."""
    scale = g_ref[...] * lax.rsqrt(var + EPS)      # (ct, 1)
    shift = b_ref[...] - mean * scale              # (ct, 1)
    z = y * scale + shift
    return z * jax.nn.sigmoid(z)                   # SiLU


def _downconv_kernel_single(x_ref, w_ref, g_ref, b_ref, o_ref):
    """Whole image per grid step: conv + instance-norm + SiLU in one pass."""
    y = _conv_tile(x_ref, w_ref)                   # (ct, S) f32
    inv_s = 1.0 / y.shape[1]
    mean = jnp.sum(y, axis=1, keepdims=True) * inv_s
    var = jnp.sum(y * y, axis=1, keepdims=True) * inv_s - mean * mean
    o_ref[0] = _norm_act(y, g_ref, b_ref, mean, var).astype(o_ref.dtype)


def _downconv_kernel_tiled(x_ref, w_ref, g_ref, b_ref, o_ref, s1_ref, s2_ref,
                           *, inv_s):
    """Spatially tiled, two-phase instance norm.

    Grid = (N, Cout-tiles, phase, S-tiles).  Phase 0: accumulate per-channel
    sum / sum-of-squares of the conv output into persistent VMEM scratch.
    Phase 1: recompute the tile conv, normalize + SiLU + store.
    """
    p = pl.program_id(2)
    s = pl.program_id(3)
    y = _conv_tile(x_ref, w_ref)                   # (ct, th*W2) f32

    @pl.when(jnp.logical_and(p == 0, s == 0))
    def _():
        s1_ref[...] = jnp.zeros_like(s1_ref)
        s2_ref[...] = jnp.zeros_like(s2_ref)

    @pl.when(p == 0)
    def _():
        s1_ref[...] += jnp.sum(y, axis=1, keepdims=True)
        s2_ref[...] += jnp.sum(y * y, axis=1, keepdims=True)

    @pl.when(p == 1)
    def _():
        mean = s1_ref[...] * inv_s
        var = s2_ref[...] * inv_s - mean * mean
        o_ref[0] = _norm_act(y, g_ref, b_ref, mean, var).astype(o_ref.dtype)


# ----------------------------------------------------------------------------- wrapper
def _vmem_capacity_bytes():
    try:
        cap = int(getattr(pltpu.get_tpu_info(), "vmem_capacity_bytes", 0))
        if cap > 0:
            return cap
    except Exception:
        pass
    return 64 * 1024 * 1024   # conservative fallback (v7x per-TensorCore VMEM)


def _pick_row_tile(H2, W2, per_row_bytes, budget_bytes):
    """Largest row tile th (divisor of H2) whose working set fits the budget and
    whose flattened spatial extent th*W2 stays lane-aligned (%128); falls back
    to the whole image when no legal tiling exists."""
    if H2 * per_row_bytes <= budget_bytes:
        return H2
    for th in range(H2 - 1, 0, -1):
        if H2 % th == 0 and th * per_row_bytes <= budget_bytes and (th * W2) % 128 == 0:
            return th
    return H2


def down_conv_block_from_nhwc(x_nhwc, w_oihw, gamma, beta, *, groups, row_tile=None):
    """x_nhwc: (N, H, W, Cin) (f32 or bf16).  Returns NCHW (N, Cout, H/2, W/2) bf16."""
    N, H, W, Cin = x_nhwc.shape
    Cout = w_oihw.shape[0]
    assert H % 2 == 0 and W % 2 == 0, "Conv2d(k=2, s=2, padding=0) needs even H, W"
    assert Cin % groups == 0 and Cout % groups == 0
    H2, W2 = H // 2, W // 2
    S = H2 * W2
    Cg, Og = Cin // groups, Cout // groups
    K = 2 * Cin

    # (N,H,W,Cin) -> (N,H2,2,W2,2*Cin) is a free row-major relabel; f = kw*Cin + cin.
    xr = x_nhwc.reshape(N, H2, 2, W2, K)

    # Grouped conv weight -> per-kh dense (Cout, 2*Cin) matrices; group structure
    # is baked into zeros via a single einsum (no per-call loop of .at[].set).
    # TODO(synk): for large per-group channel counts, add a group grid axis with
    # per-group (Og, 2*Cg) weights and group-sliced x blocks instead of the
    # zero-padded dense weight (saves a `groups` factor of MXU work and x VMEM);
    # needs a (group, kw, c) feature layout to keep the lane dim 128-aligned.
    wt = jnp.transpose(w_oihw.astype(jnp.float32), (2, 3, 1, 0))      # (2,2,Cg,Cout)
    wt = wt.reshape(2, 2, Cg, groups, Og)
    eye = jnp.eye(groups, dtype=jnp.float32)
    wd = jnp.einsum("hwcgo,fg->hwfcgo", wt, eye).reshape(2, 2, Cin, Cout)
    wk = jnp.transpose(wd, (0, 3, 1, 2)).reshape(2, Cout, K).astype(jnp.bfloat16)

    gamma2 = gamma.reshape(Cout, 1).astype(jnp.float32)
    beta2 = beta.reshape(Cout, 1).astype(jnp.float32)

    # Output-channel tile (sublane dim of the channel-major output).
    if Cout % 256 == 0:
        ct = 256
    elif Cout % 128 == 0:
        ct = 128
    elif Cout % 64 == 0:
        ct = 64
    else:
        ct = Cout
    n_ct = Cout // ct

    # Generation-aware tiling / VMEM budgeting.
    vmem_cap = _vmem_capacity_bytes()
    x_bytes = jnp.dtype(xr.dtype).itemsize
    per_row = (2 * (2 * W2 * K * x_bytes)        # x rows, double-buffered
               + 2 * (ct * W2 * 2)               # bf16 output rows, double-buffered
               + ct * W2 * 4                     # live f32 conv tile
               + 2 * W2 * K * 2)                 # bf16 matmul operand copies
    th = row_tile if row_tile is not None else _pick_row_tile(H2, W2, per_row, vmem_cap // 8)
    assert H2 % th == 0
    n_s = H2 // th
    s_t = th * W2

    vmem_need = (2 * (th * 2 * W2 * K * x_bytes + 2 * ct * K * 2 + ct * s_t * 2 + 2 * ct * 4)
                 + ct * s_t * 4 + 2 * s_t * K * 2 + 4 * ct * 4)
    vmem_limit = int(min(max(vmem_need + (16 << 20), 32 << 20), vmem_cap - (4 << 20)))

    out_shape = jax.ShapeDtypeStruct((N, Cout, S), jnp.bfloat16)

    if n_s == 1:
        # Small images: single-pass kernel, whole sample per grid step.
        sem = ("parallel", "arbitrary") if N > 1 else ("parallel", "parallel")
        out = pl.pallas_call(
            _downconv_kernel_single,
            out_shape=out_shape,
            grid_spec=pltpu.PrefetchScalarGridSpec(
                num_scalar_prefetch=0,
                grid=(N, n_ct),
                in_specs=[
                    pl.BlockSpec((1, H2, 2, W2, K), lambda n, c: (n, 0, 0, 0, 0)),
                    pl.BlockSpec((2, ct, K), lambda n, c: (0, c, 0)),
                    pl.BlockSpec((ct, 1), lambda n, c: (c, 0)),
                    pl.BlockSpec((ct, 1), lambda n, c: (c, 0)),
                ],
                out_specs=pl.BlockSpec((1, ct, S), lambda n, c: (n, c, 0)),
            ),
            compiler_params=pltpu.CompilerParams(
                dimension_semantics=sem, vmem_limit_bytes=vmem_limit),
        )(xr, wk, gamma2, beta2)
    else:
        # Large images: S-tiled two-phase kernel (stats sweep + normalize sweep).
        sem = (("parallel", "arbitrary", "arbitrary", "arbitrary") if N > 1
               else ("parallel", "parallel", "arbitrary", "arbitrary"))
        kernel = functools.partial(_downconv_kernel_tiled, inv_s=1.0 / S)
        out = pl.pallas_call(
            kernel,
            out_shape=out_shape,
            grid_spec=pltpu.PrefetchScalarGridSpec(
                num_scalar_prefetch=0,
                grid=(N, n_ct, 2, n_s),
                in_specs=[
                    pl.BlockSpec((1, th, 2, W2, K), lambda n, c, p, s: (n, s, 0, 0, 0)),
                    pl.BlockSpec((2, ct, K), lambda n, c, p, s: (0, c, 0)),
                    pl.BlockSpec((ct, 1), lambda n, c, p, s: (c, 0)),
                    pl.BlockSpec((ct, 1), lambda n, c, p, s: (c, 0)),
                ],
                out_specs=pl.BlockSpec((1, ct, s_t), lambda n, c, p, s: (n, c, p * s)),
                scratch_shapes=[pltpu.VMEM((ct, 1), jnp.float32),
                                pltpu.VMEM((ct, 1), jnp.float32)],
            ),
            compiler_params=pltpu.CompilerParams(
                dimension_semantics=sem, vmem_limit_bytes=vmem_limit),
        )(xr, wk, gamma2, beta2)

    # (N, Cout, S) -> (N, Cout, H2, W2): free reshape to the module's NCHW output.
    return out.reshape(N, Cout, H2, W2)


def down_conv_block(x_nchw, w_oihw, gamma, beta, *, groups, row_tile=None):
    """NCHW entry matching the PyTorch module.  Output is bf16 NCHW.
    TODO(synk): keep the surrounding model channels-last (or fuse this
    transpose+cast into the producing layer) and call down_conv_block_from_nhwc
    directly; that removes the last extra HBM pass over x."""
    x_nhwc = jnp.transpose(x_nchw, (0, 2, 3, 1)).astype(jnp.bfloat16)
    return down_conv_block_from_nhwc(x_nhwc, w_oihw, gamma, beta,
                                     groups=groups, row_tile=row_tile)


# ----------------------------------------------------------------------------- reference & test
def _reference(x, w_oihw, gamma, beta, *, groups):
    y = lax.conv_general_dilated(
        x.astype(jnp.float32), w_oihw.astype(jnp.float32),
        window_strides=(2, 2), padding="VALID",
        dimension_numbers=("NCHW", "OIHW", "NCHW"),
        feature_group_count=groups)
    mean = y.mean(axis=(2, 3), keepdims=True)
    var = ((y - mean) ** 2).mean(axis=(2, 3), keepdims=True)
    z = (y - mean) / jnp.sqrt(var + EPS) * gamma[None, :, None, None] + beta[None, :, None, None]
    return z * jax.nn.sigmoid(z)


if __name__ == "__main__":
    key = jax.random.PRNGKey(0)

    def make_case(k, N, Cin, H, W, Cout, groups):
        kx, kw, kg, kb = jax.random.split(k, 4)
        x = jax.random.normal(kx, (N, Cin, H, W), jnp.float32)
        w = jax.random.normal(kw, (Cout, Cin // groups, 2, 2), jnp.float32) * 0.3
        gamma = 1.0 + 0.1 * jax.random.normal(kg, (Cout,), jnp.float32)
        beta = 0.1 * jax.random.normal(kb, (Cout,), jnp.float32)
        return x, w, gamma, beta

    def check(out, ref, name):
        out = jnp.asarray(out, jnp.float32)
        assert out.shape == ref.shape, (name, out.shape, ref.shape)
        err = jnp.abs(out - ref)
        tol = 3e-2 + 3e-2 * jnp.abs(ref)   # relative check: stats bugs can't hide under bf16 noise
        assert bool(jnp.all(err <= tol)), (name, float(jnp.max(err)))

    k1, k2 = jax.random.split(key)

    # Case 1: module-sized shapes (in=4, out=8, groups=2) -> single-pass path.
    N, Cin, H, W, Cout, groups = 2, 4, 16, 16, 8, 2
    x, w, gamma, beta = make_case(k1, N, Cin, H, W, Cout, groups)
    fn = jax.jit(functools.partial(down_conv_block, groups=groups))
    out = jax.block_until_ready(fn(x, w, gamma, beta))
    check(out, _reference(x, w, gamma, beta, groups=groups), "single_pass")

    # Case 2: forces the S-tiled two-phase path (row_tile=8 -> 2 spatial tiles).
    N, Cin, H, W, Cout, groups = 1, 8, 32, 32, 16, 2
    x, w, gamma, beta = make_case(k2, N, Cin, H, W, Cout, groups)
    fn = jax.jit(functools.partial(down_conv_block, groups=groups, row_tile=8))
    out = jax.block_until_ready(fn(x, w, gamma, beta))
    check(out, _reference(x, w, gamma, beta, groups=groups), "s_tiled")

    print("KERNEL_OK")
</pallas_src>

<mosaic_0001>
module attributes {stable_mosaic.version = 11 : i64} {
  func.func @_downconv_kernel_single(%arg0: i32, %arg1: i32, %arg2: memref<1x8x2x8x8xbf16, #tpu.memory_space<vmem>>, %arg3: memref<2x8x8xbf16, #tpu.memory_space<vmem>>, %arg4: memref<8x1xf32, #tpu.memory_space<vmem>>, %arg5: memref<8x1xf32, #tpu.memory_space<vmem>>, %arg6: memref<1x8x64xbf16, #tpu.memory_space<vmem>>) attributes {dimension_semantics = [#tpu.dimension_semantics<parallel>, #tpu.dimension_semantics<arbitrary>], iteration_bounds = array<i64: 2, 1>, scalar_prefetch = 0 : i64, scratch_operands = 0 : i64, tpu.core_type = #tpu.core_type<tc>, window_params = [{transform_indices = @transform_0, window_bounds = array<i64: 1, 8, 2, 8, 8>}, {transform_indices = @transform_1, window_bounds = array<i64: 2, 8, 8>}, {transform_indices = @transform_2, window_bounds = array<i64: 8, 1>}, {transform_indices = @transform_3, window_bounds = array<i64: 8, 1>}, {transform_indices = @transform_4, window_bounds = array<i64: 1, 8, 64>}]} {
    %c0 = arith.constant 0 : index
    %c0_0 = arith.constant 0 : index
    %c0_1 = arith.constant 0 : index
    %c0_2 = arith.constant 0 : index
    %c0_3 = arith.constant 0 : index
    %0 = vector.load %arg2[%c0, %c0_0, %c0_1, %c0_2, %c0_3] : memref<1x8x2x8x8xbf16, #tpu.memory_space<vmem>>, vector<1x8x1x8x8xbf16>
    %1 = vector.shape_cast %0 : vector<1x8x1x8x8xbf16> to vector<8x8x8xbf16>
    %2 = vector.shape_cast %1 : vector<8x8x8xbf16> to vector<64x8xbf16>
    %c0_4 = arith.constant 0 : index
    %c0_5 = arith.constant 0 : index
    %c1 = arith.constant 1 : index
    %c0_6 = arith.constant 0 : index
    %c0_7 = arith.constant 0 : index
    %3 = vector.load %arg2[%c0_4, %c0_5, %c1, %c0_6, %c0_7] : memref<1x8x2x8x8xbf16, #tpu.memory_space<vmem>>, vector<1x8x1x8x8xbf16>
    %4 = vector.shape_cast %3 : vector<1x8x1x8x8xbf16> to vector<8x8x8xbf16>
    %5 = vector.shape_cast %4 : vector<8x8x8xbf16> to vector<64x8xbf16>
    %c0_8 = arith.constant 0 : index
    %c0_9 = arith.constant 0 : index
    %c0_10 = arith.constant 0 : index
    %6 = vector.load %arg3[%c0_8, %c0_9, %c0_10] : memref<2x8x8xbf16, #tpu.memory_space<vmem>>, vector<1x8x8xbf16>
    %7 = vector.shape_cast %6 : vector<1x8x8xbf16> to vector<8x8xbf16>
    %cst = arith.constant dense<0.000000e+00> : vector<8x64xf32>
    %8 = tpu.matmul %7, %2, %cst {dimension_numbers = #tpu.dot_dimension_numbers<[1], [1], [0], [0], [0, 0, 1, 0], [], []>} : vector<8x8xbf16>, vector<64x8xbf16>, vector<8x64xf32> -> vector<8x64xf32>
    %c1_11 = arith.constant 1 : index
    %c0_12 = arith.constant 0 : index
    %c0_13 = arith.constant 0 : index
    %9 = vector.load %arg3[%c1_11, %c0_12, %c0_13] : memref<2x8x8xbf16, #tpu.memory_space<vmem>>, vector<1x8x8xbf16>
    %10 = vector.shape_cast %9 : vector<1x8x8xbf16> to vector<8x8xbf16>
    %cst_14 = arith.constant dense<0.000000e+00> : vector<8x64xf32>
    %11 = tpu.matmul %10, %5, %cst_14 {dimension_numbers = #tpu.dot_dimension_numbers<[1], [1], [0], [0], [0, 0, 1, 0], [], []>} : vector<8x8xbf16>, vector<64x8xbf16>, vector<8x64xf32> -> vector<8x64xf32>
    %12 = arith.addf %8, %11 : vector<8x64xf32>
    %cst_15 = arith.constant dense<0.000000e+00> : vector<8xf32>
    %13 = vector.multi_reduction <add>, %12, %cst_15 [1] : vector<8x64xf32> to vector<8xf32>
    %14 = vector.shape_cast %13 : vector<8xf32> to vector<8x1xf32>
    %cst_16 = arith.constant 1.562500e-02 : f32
    %15 = vector.broadcast %cst_16 : f32 to vector<8x1xf32>
    %16 = arith.mulf %14, %15 : vector<8x1xf32>
    %17 = arith.mulf %12, %12 : vector<8x64xf32>
    %cst_17 = arith.constant dense<0.000000e+00> : vector<8xf32>
    %18 = vector.multi_reduction <add>, %17, %cst_17 [1] : vector<8x64xf32> to vector<8xf32>
    %19 = vector.shape_cast %18 : vector<8xf32> to vector<8x1xf32>
    %cst_18 = arith.constant 1.562500e-02 : f32
    %20 = vector.broadcast %cst_18 : f32 to vector<8x1xf32>
    %21 = arith.mulf %19, %20 : vector<8x1xf32>
    %22 = arith.mulf %16, %16 : vector<8x1xf32>
    %23 = arith.subf %21, %22 : vector<8x1xf32>
    %c0_19 = arith.constant 0 : index
    %c0_20 = arith.constant 0 : index
    %24 = vector.load %arg4[%c0_19, %c0_20] : memref<8x1xf32, #tpu.memory_space<vmem>>, vector<8x1xf32>
    %cst_21 = arith.constant 9.99999974E-6 : f32
    %25 = vector.broadcast %cst_21 : f32 to vector<8x1xf32>
    %26 = arith.addf %23, %25 : vector<8x1xf32>
    %27 = math.rsqrt %26 : vector<8x1xf32>
    %28 = arith.mulf %24, %27 : vector<8x1xf32>
    %c0_22 = arith.constant 0 : index
    %c0_23 = arith.constant 0 : index
    %29 = vector.load %arg5[%c0_22, %c0_23] : memref<8x1xf32, #tpu.memory_space<vmem>>, vector<8x1xf32>
    %30 = arith.mulf %16, %28 : vector<8x1xf32>
    %31 = arith.subf %29, %30 : vector<8x1xf32>
    %32 = vector.broadcast %28 : vector<8x1xf32> to vector<8x64xf32>
    %33 = arith.mulf %12, %32 : vector<8x64xf32>
    %34 = vector.broadcast %31 : vector<8x1xf32> to vector<8x64xf32>
    %35 = arith.addf %33, %34 : vector<8x64xf32>
    %36 = arith.negf %35 : vector<8x64xf32>
    %37 = math.exp %36 : vector<8x64xf32>
    %cst_24 = arith.constant 1.000000e+00 : f32
    %38 = vector.broadcast %cst_24 : f32 to vector<8x64xf32>
    %39 = arith.addf %38, %37 : vector<8x64xf32>
    %40 = arith.divf %38, %39 : vector<8x64xf32>
    %41 = arith.mulf %35, %40 : vector<8x64xf32>
    %42 = arith.truncf %41 : vector<8x64xf32> to vector<8x64xbf16>
    %c0_25 = arith.constant 0 : index
    %c0_26 = arith.constant 0 : index
    %c0_27 = arith.constant 0 : index
    %43 = vector.load %arg6[%c0_25, %c0_26, %c0_27] : memref<1x8x64xbf16, #tpu.memory_space<vmem>>, vector<1x8x64xbf16>
    %44 = vector.shape_cast %43 : vector<1x8x64xbf16> to vector<8x64xbf16>
    %45 = vector.shape_cast %42 : vector<8x64xbf16> to vector<1x8x64xbf16>
    tpu.vector_store %arg6[%c0_25, %c0_26, %c0_27], %45 {strides = array<i32>} : memref<1x8x64xbf16, #tpu.memory_space<vmem>>, vector<1x8x64xbf16>,
    return
  }
  func.func @transform_0(%arg0: i32, %arg1: i32) -> (i32, i32, i32, i32, i32) {
    %c0_i32 = arith.constant 0 : i32
    %c0_i32_0 = arith.constant 0 : i32
    %c0_i32_1 = arith.constant 0 : i32
    %c0_i32_2 = arith.constant 0 : i32
    %c0_i32_3 = arith.constant 0 : i32
    return %arg0, %c0_i32, %c0_i32_0, %c0_i32_1, %c0_i32_2 : i32, i32, i32, i32, i32
  }
  func.func @transform_1(%arg0: i32, %arg1: i32) -> (i32, i32, i32) {
    %c0_i32 = arith.constant 0 : i32
    %c0_i32_0 = arith.constant 0 : i32
    %c0_i32_1 = arith.constant 0 : i32
    return %c0_i32, %arg1, %c0_i32_0 : i32, i32, i32
  }
  func.func @transform_2(%arg0: i32, %arg1: i32) -> (i32, i32) {
    %c0_i32 = arith.constant 0 : i32
    %c0_i32_0 = arith.constant 0 : i32
    return %arg1, %c0_i32 : i32, i32
  }
  func.func @transform_3(%arg0: i32, %arg1: i32) -> (i32, i32) {
    %c0_i32 = arith.constant 0 : i32
    %c0_i32_0 = arith.constant 0 : i32
    return %arg1, %c0_i32 : i32, i32
  }
  func.func @transform_4(%arg0: i32, %arg1: i32) -> (i32, i32, i32) {
    %c0_i32 = arith.constant 0 : i32
    %c0_i32_0 = arith.constant 0 : i32
    return %arg0, %arg1, %c0_i32 : i32, i32, i32
  }
}

</mosaic_0001>

<llo_original>
// kernel: down_conv_block.1
$region0: #{down_conv_block.1}
  #allocation0 [shape = 'u32[]', space=smem, size = 0x4, offset = 0x4, fixed_abs, tag = 'smem constant byte address 0x4 - core index']
  #allocation1 [shape = 'u32[72,128]{1,0:T(1,128)}', space=vmem, size = 0x9000, scoped, tag = 'internal scratch']
  %s0 = inlined_call_operand.vmem [shape: bf16[2,8,2,8,8], index: 0, kind: input, shape index: {}]
  %s1 = inlined_call_operand.vmem [shape: bf16[2,8,8], index: 1, kind: input, shape index: {}]
  %s2 = inlined_call_operand.vmem [shape: f32[8,1], index: 2, kind: input, shape index: {}]
  %s3 = inlined_call_operand.vmem [shape: f32[8,1], index: 3, kind: input, shape index: {}]
  %s4 = inlined_call_operand.vmem [shape: bf16[2,8,64], index: 4, kind: output, shape index: {}]
  %s5 = sld [smem:[#allocation0]]
  $region49: #{down_conv_block.1} parent=0
    _
  %s7 = ssub.s32 1, %s5
  %s8 = scalar_select 0, %s7, %s5
  loop: start=0, step=1, limit=4
  $region2: #{down_conv_block.1} parent=0 // loop_pre_header
    _
  $region3: #{down_conv_block.1} parent=0 // loop_header
    %s10 = sphi 0, %s14
    %p11 = scmp.ge.s32.totalorder %s10, 4
    %s17 = sphi 0, %s29
    %s18 = sphi 0, %s25
    %s19 = sphi 0, %s17
    %s20 = sphi 0, %s18
    %s21 = sphi 0, %s19
    %s22 = sphi 0, %s20
    %s32 = sphi 0, %s34
    %s35 = sphi 0, %s32
    %s36 = sphi 0, %s35
    %s52 = sphi 0, %s36
    %s58 = sphi 0, %s60
    %s61 = sphi 0, %s58
    %s62 = sphi 0, %s61
    %s78 = sphi 0, %s62
    %s84 = sphi 0, %s86
    %s87 = sphi 0, %s84
    %s88 = sphi 0, %s87
    %s104 = sphi 0, %s88
    %s110 = sphi 0, %s112
    %s113 = sphi 0, %s110
    %s114 = sphi 0, %s113
    %s130 = sphi 0, %s114
    %s138 = sphi 0, %s140
    %s141 = sphi 0, %s138
    %s142 = sphi 0, %s141
    %s158 = sphi 0, %s142
  $region4: #{down_conv_block.1} parent=0 // loop_header_branch
    %13 = sbr.rel (%p11) target = $region8
  $region5: #{down_conv_block.1} parent=0 // loop_body
    %s15 = ssub.s32 %s10, 1
    %s16 = ssub.s32 %s10, 2
    %s23 = sadd.s32 1, %s18
    %p24 = scmp.ge.s32.totalorder %s23, 1
    %s25 = scalar_select %p24, 0, %s23
    %s26 = sadd.s32 1, %s17
    %s27 = scalar_select %p24, %s26, %s17
    %p28 = scmp.ge.s32.totalorder %s27, 2
    %s29 = scalar_select %p28, 0, %s27
    %s30 = ssub.s32 %s17, %s29
    %p31 = scmp.eq.s32.totalorder %s30, 0
    %s33 = sadd.s32 %s32, 1
    %s34 = scalar_select %p31, %s32, %s33
    %p37 = pneg %p31
    %p38 = scmp.eq.s32.totalorder %s10, 1
    %p39 = por %p37, %p38
    %p40 = scmp.ne.s32.totalorder %s32, %s35
    %p41 = scmp.eq.s32.totalorder %s10, 0
    %p42 = por %p40, %p41
    %p43 = scmp.ne.s32.totalorder %s32, %s35
    %p44 = scmp.eq.s32.totalorder %s15, 1
    %p45 = por %p43, %p44
    %p46 = scmp.ne.s32.totalorder %s35, %s36
    %p47 = scmp.eq.s32.totalorder %s15, 0
    %p48 = por %p46, %p47
    %p49 = scmp.ne.s32.totalorder %s35, %s36
    %p50 = scmp.eq.s32.totalorder %s16, 1
    %p51 = por %p49, %p50
    %p53 = scmp.ne.s32.totalorder %s36, %s52
    %p54 = scmp.eq.s32.totalorder %s16, 0
    %p55 = por %p53, %p54
    %s56 = ssub.s32 %s18, %s25
    %p57 = scmp.eq.s32.totalorder %s56, 0
    %s59 = sadd.s32 %s58, 1
    %s60 = scalar_select %p57, %s58, %s59
    %p63 = pneg %p57
    %p64 = scmp.eq.s32.totalorder %s10, 1
    %p65 = por %p63, %p64
    %p66 = scmp.ne.s32.totalorder %s58, %s61
    %p67 = scmp.eq.s32.totalorder %s10, 0
    %p68 = por %p66, %p67
    %p69 = scmp.ne.s32.totalorder %s58, %s61
    %p70 = scmp.eq.s32.totalorder %s15, 1
    %p71 = por %p69, %p70
    %p72 = scmp.ne.s32.totalorder %s61, %s62
    %p73 = scmp.eq.s32.totalorder %s15, 0
    %p74 = por %p72, %p73
    %p75 = scmp.ne.s32.totalorder %s61, %s62
    %p76 = scmp.eq.s32.totalorder %s16, 1
    %p77 = por %p75, %p76
    %p79 = scmp.ne.s32.totalorder %s62, %s78
    %p80 = scmp.eq.s32.totalorder %s16, 0
    %p81 = por %p79, %p80
    %s82 = ssub.s32 %s18, %s25
    %p83 = scmp.eq.s32.totalorder %s82, 0
    %s85 = sadd.s32 %s84, 1
    %s86 = scalar_select %p83, %s84, %s85
    %p89 = pneg %p83
    %p90 = scmp.eq.s32.totalorder %s10, 1
    %p91 = por %p89, %p90
    %p92 = scmp.ne.s32.totalorder %s84, %s87
    %p93 = scmp.eq.s32.totalorder %s10, 0
    %p94 = por %p92, %p93
    %p95 = scmp.ne.s32.totalorder %s84, %s87
    %p96 = scmp.eq.s32.totalorder %s15, 1
    %p97 = por %p95, %p96
    %p98 = scmp.ne.s32.totalorder %s87, %s88
    %p99 = scmp.eq.s32.totalorder %s15, 0
    %p100 = por %p98, %p99
    %p101 = scmp.ne.s32.totalorder %s87, %s88
    %p102 = scmp.eq.s32.totalorder %s16, 1
    %p103 = por %p101, %p102
    %p105 = scmp.ne.s32.totalorder %s88, %s104
    %p106 = scmp.eq.s32.totalorder %s16, 0
    %p107 = por %p105, %p106
    %s108 = ssub.s32 %s18, %s25
    %p109 = scmp.eq.s32.totalorder %s108, 0
    %s111 = sadd.s32 %s110, 1
    %s112 = scalar_select %p109, %s110, %s111
    %p115 = pneg %p109
    %p116 = scmp.eq.s32.totalorder %s10, 1
    %p117 = por %p115, %p116
    %p118 = scmp.ne.s32.totalorder %s110, %s113
    %p119 = scmp.eq.s32.totalorder %s10, 0
    %p120 = por %p118, %p119
    %p121 = scmp.ne.s32.totalorder %s110, %s113
    %p122 = scmp.eq.s32.totalorder %s15, 1
    %p123 = por %p121, %p122
    %p124 = scmp.ne.s32.totalorder %s113, %s114
    %p125 = scmp.eq.s32.totalorder %s15, 0
    %p126 = por %p124, %p125
    %p127 = scmp.ne.s32.totalorder %s113, %s114
    %p128 = scmp.eq.s32.totalorder %s16, 1
    %p129 = por %p127, %p128
    %p131 = scmp.ne.s32.totalorder %s114, %s130
    %p132 = scmp.eq.s32.totalorder %s16, 0
    %p133 = por %p131, %p132
    %s134 = ssub.s32 %s17, %s29
    %s135 = ssub.s32 %s18, %s25
    %s136 = sor.u32 %s134, %s135
    %p137 = scmp.eq.s32.totalorder %s136, 0
    %s139 = sadd.s32 %s138, 1
    %s140 = scalar_select %p137, %s138, %s139
    %p143 = pneg %p137
    %p144 = scmp.eq.s32.totalorder %s10, 1
    %p145 = por %p143, %p144
    %p146 = scmp.ne.s32.totalorder %s138, %s141
    %p147 = scmp.eq.s32.totalorder %s10, 0
    %p148 = por %p146, %p147
    %p149 = scmp.ne.s32.totalorder %s138, %s141
    %p150 = scmp.eq.s32.totalorder %s15, 1
    %p151 = por %p149, %p150
    %p152 = scmp.ne.s32.totalorder %s141, %s142
    %p153 = scmp.eq.s32.totalorder %s15, 0
    %p154 = por %p152, %p153
    %p155 = scmp.ne.s32.totalorder %s141, %s142
    %p156 = scmp.eq.s32.totalorder %s16, 1
    %p157 = por %p155, %p156
    %p159 = scmp.ne.s32.totalorder %s142, %s158
    %p160 = scmp.eq.s32.totalorder %s16, 0
    %p161 = por %p159, %p160
    %p162 = scmp.le.s32.totalorder 1, %s10
    %p163 = scmp.lt.s32.totalorder %s10, 3
    %p164 = pnand %p162, %p163
    %p165 = pneg %p164
    // Predicated region
    $region9: #{down_conv_block.1} parent=5 // pred_check
      _
    $region10: #{down_conv_block.1} parent=5 // pred_check_branch
      %167 = sbr.rel (%p164) target = $region12
    $region11: #{down_conv_block.1} parent=5 // pred_region
      %s168 = ssub.s32 %s10, 1
      // Predicated region
      $region13: #{down_conv_block.1} parent=11 // pred_check
        %p169 = pneg %p74
      $region14: #{down_conv_block.1} parent=11 // pred_check_branch
        %171 = sbr.rel (%p169) target = $region16
      $region15: #{down_conv_block.1} parent=11 // pred_region
        %p172 = scmp.lt.s32.totalorder %s20, 0
        %s173 = scalar_select %p172, %s20, 0
        %s174 = smul.addr %s173, 4
        %s175 = scalar_lea.vmem %s1, %s174
      $region16: #{down_conv_block.1} parent=11 // pred_fallthru
        _
      // Predicated region
      $region17: #{down_conv_block.1} parent=11 // pred_check
        %p176 = pneg %p100
      $region18: #{down_conv_block.1} parent=11 // pred_check_branch
        %178 = sbr.rel (%p176) target = $region20
      $region19: #{down_conv_block.1} parent=11 // pred_region
        %p179 = scmp.lt.s32.totalorder %s20, 0
        %s180 = scalar_select %p179, %s20, 0
        %s181 = smul.addr %s180, 8
        %s182 = scalar_lea.vmem %s2, %s181
      $region20: #{down_conv_block.1} parent=11 // pred_fallthru
        _
      // Predicated region
      $region21: #{down_conv_block.1} parent=11 // pred_check
        %p183 = pneg %p126
      $region22: #{down_conv_block.1} parent=11 // pred_check_branch
        %185 = sbr.rel (%p183) target = $region24
      $region23: #{down_conv_block.1} parent=11 // pred_region
        %p186 = scmp.lt.s32.totalorder %s20, 0
        %s187 = scalar_select %p186, %s20, 0
        %s188 = smul.addr %s187, 8
        %s189 = scalar_lea.vmem %s3, %s188
      $region24: #{down_conv_block.1} parent=11 // pred_fallthru
        _
    $region12: #{down_conv_block.1} parent=5 // pred_fallthru
      _
    %p190 = scmp.lt.s32.totalorder %s10, 2
    // Predicated region
    $region25: #{down_conv_block.1} parent=5 // pred_check
      %p191 = pneg %p190
    $region26: #{down_conv_block.1} parent=5 // pred_check_branch
      %193 = sbr.rel (%p191) target = $region28
    $region27: #{down_conv_block.1} parent=5 // pred_region
      // Predicated region
      $region29: #{down_conv_block.1} parent=27 // pred_check
        %p194 = pneg %p42
      $region30: #{down_conv_block.1} parent=27 // pred_check_branch
        %196 = sbr.rel (%p194) target = $region32
      $region31: #{down_conv_block.1} parent=27 // pred_region
        %p197 = scmp.lt.s32.totalorder %s17, 1
        %s198 = scalar_select %p197, %s17, 1
        %s199 = smul.addr %s198, 16
        %s200 = smul.addr %s199, 4
        %s201 = scalar_lea.vmem %s0, %s200
      $region32: #{down_conv_block.1} parent=27 // pred_fallthru
        _
    $region28: #{down_conv_block.1} parent=5 // pred_fallthru
      _
    %p202 = scmp.le.s32.totalorder 1, %s10
    %p203 = scmp.lt.s32.totalorder %s10, 3
    %p204 = pnand %p202, %p203
    %p205 = pneg %p204
    // Predicated region
    $region33: #{down_conv_block.1} parent=5 // pred_check
      _
    $region34: #{down_conv_block.1} parent=5 // pred_check_branch
      %207 = sbr.rel (%p204) target = $region36
    $region35: #{down_conv_block.1} parent=5 // pred_region
      %s208 = ssub.s32 %s10, 1
      %p209 = scmp.lt.s32.totalorder %s19, 1
      %s210 = scalar_select %p209, %s19, 1
      %s211 = smul.addr %s210, 16
      %s212 = smul.addr %s211, 4
      %s213 = scalar_lea.vmem %s0, %s212
      %p214 = pneg %p48
      %p215 = pneg %p45
      %p216 = scmp.lt.s32.totalorder %s20, 0
      %s217 = scalar_select %p216, %s20, 0
      %s218 = smul.addr %s217, 4
      %s219 = scalar_lea.vmem %s1, %s218
      %p220 = pneg %p74
      %p221 = pneg %p71
      %p222 = scmp.lt.s32.totalorder %s20, 0
      %s223 = scalar_select %p222, %s20, 0
      %s224 = smul.addr %s223, 8
      %s225 = scalar_lea.vmem %s2, %s224
      %p226 = pneg %p100
      %p227 = pneg %p97
      %p228 = scmp.lt.s32.totalorder %s20, 0
      %s229 = scalar_select %p228, %s20, 0
      %s230 = smul.addr %s229, 8
      %s231 = scalar_lea.vmem %s3, %s230
      %p232 = pneg %p126
      %p233 = pneg %p123
      %p234 = pneg %p154
      %p235 = pneg %p151
      %p236 = scmp.lt.s32.totalorder %s19, 1
      %s237 = scalar_select %p236, %s19, 1
      %p238 = scmp.lt.s32.totalorder %s20, 0
      %s239 = scalar_select %p238, %s20, 0
      %s240 = sadd.s32 %s239, %s237
      %s241 = smul.addr %s240, 4
      %s242 = scalar_lea.vmem %s4, %s241
      %p243 = scmp.lt.s32.totalorder %s19, 1
      %s244 = scalar_select %p243, %s19, 1
      %s245 = smul.addr %s244, 16
      %s246 = smul.addr %s245, 4
      %s247 = scalar_lea.vmem %s0, %s246
      %p248 = scmp.lt.s32.totalorder %s20, 0
      %s249 = scalar_select %p248, %s20, 0
      %s250 = smul.addr %s249, 4
      %s251 = scalar_lea.vmem %s1, %s250
      %p252 = scmp.lt.s32.totalorder %s20, 0
      %s253 = scalar_select %p252, %s20, 0
      %s254 = smul.addr %s253, 8
      %s255 = scalar_lea.vmem %s2, %s254
      %p256 = scmp.lt.s32.totalorder %s20, 0
      %s257 = scalar_select %p256, %s20, 0
      %s258 = smul.addr %s257, 8
      %s259 = scalar_lea.vmem %s3, %s258
      %p260 = scmp.lt.s32.totalorder %s19, 1
      %s261 = scalar_select %p260, %s19, 1
      %p262 = scmp.lt.s32.totalorder %s20, 0
      %s263 = scalar_select %p262, %s20, 0
      %s264 = sadd.s32 %s263, %s261
      %s265 = smul.addr %s264, 4
      %s266 = scalar_lea.vmem %s4, %s265
      %v268 = vld [vmem:[%s247] sm:$0xf]
      %v269 = vld [vmem:[%s247 + $0x8] sm:$0xf]
      %v270 = vld [vmem:[%s247 + $0x10] sm:$0xf]
      %v271 = vld [vmem:[%s247 + $0x18] sm:$0xf]
      %v272 = vld [vmem:[%s247 + $0x20] sm:$0xf]
      %v273 = vld [vmem:[%s247 + $0x28] sm:$0xf]
      %v274 = vld [vmem:[%s247 + $0x30] sm:$0xf]
      %v275 = vld [vmem:[%s247 + $0x38] sm:$0xf]
      %s276 = scalar_lea.vmem %s247, 4
      %v277 = vld [vmem:[%s276] sm:$0xf]
      %v278 = vld [vmem:[%s276 + $0x8] sm:$0xf]
      %v279 = vld [vmem:[%s276 + $0x10] sm:$0xf]
      %v280 = vld [vmem:[%s276 + $0x18] sm:$0xf]
      %v281 = vld [vmem:[%s276 + $0x20] sm:$0xf]
      %v282 = vld [vmem:[%s276 + $0x28] sm:$0xf]
      %v283 = vld [vmem:[%s276 + $0x30] sm:$0xf]
      %v284 = vld [vmem:[%s276 + $0x38] sm:$0xf]
      %v285 = vld [vmem:[%s251] sm:$0xf]
      %s286 = scalar_lea.vmem %s251, 4
      %v287 = vld [vmem:[%s286] sm:$0xf]
      %v296 = vunpack.c.l.b16 %v277
      %v297 = vunpack.c.l.b16 %v278
      %v298 = vunpack.c.l.b16 %v279
      %v299 = vunpack.c.l.b16 %v280
      %v300 = vunpack.c.l.b16 %v281
      %v301 = vunpack.c.l.b16 %v282
      %v302 = vunpack.c.l.b16 %v283
      %v303 = vunpack.c.l.b16 %v284
      %v304 = vpack.c.b16 %v297, %v296
      %v305 = vpack.c.b16 %v299, %v298
      %v306 = vpack.c.b16 %v301, %v300
      %v307 = vpack.c.b16 %v303, %v302
      %vm308 = vcmask 64512
      %v310 = vsel %vm308, %v287, 0
      %v313 = vsel %vm308, %v304, 0
      %v316 = vsel %vm308, %v305, 0
      %v319 = vsel %vm308, %v306, 0
      %v322 = vsel %vm308, %v307, 0
      %324 = vmatpush.bf16.xpose.msra.mxu0 0
      %325 = vmatpush.bf16.xpose.msra.mxu0 0
      %326 = vmatpush.bf16.xpose.msra.mxu0 0
      %327 = vmatpush.bf16.xpose.msra.mxu0 0
      %328 = vmatpush.bf16.xpose.msra.mxu0 %v322
      %329 = vmatpush.bf16.xpose.msra.mxu0 %v319
      %330 = vmatpush.bf16.xpose.msra.mxu0 %v316
      %331 = vmatpush.bf16.xpose.msra.mxu0 %v313
      %332 = vmatmul.bf16.gmra.mxu0 %v310
      %v333 = vpop.f32.mrf.mxu0
      %v334 = vadd.f32 0.0, %v333
      %v335 = vpop.f32.mrf.mxu0
      %336 = vdwg.mxu0
      %v345 = vunpack.c.l.b16 %v268
      %v346 = vunpack.c.l.b16 %v269
      %v347 = vunpack.c.l.b16 %v270
      %v348 = vunpack.c.l.b16 %v271
      %v349 = vunpack.c.l.b16 %v272
      %v350 = vunpack.c.l.b16 %v273
      %v351 = vunpack.c.l.b16 %v274
      %v352 = vunpack.c.l.b16 %v275
      %v353 = vpack.c.b16 %v346, %v345
      %v354 = vpack.c.b16 %v348, %v347
      %v355 = vpack.c.b16 %v350, %v349
      %v356 = vpack.c.b16 %v352, %v351
      %v358 = vsel %vm308, %v285, 0
      %v361 = vsel %vm308, %v353, 0
      %v364 = vsel %vm308, %v354, 0
      %v367 = vsel %vm308, %v355, 0
      %v370 = vsel %vm308, %v356, 0
      %372 = vmatpush.bf16.xpose.msra.mxu0 0
      %373 = vmatpush.bf16.xpose.msra.mxu0 0
      %374 = vmatpush.bf16.xpose.msra.mxu0 0
      %375 = vmatpush.bf16.xpose.msra.mxu0 0
      %376 = vmatpush.bf16.xpose.msra.mxu0 %v370
      %377 = vmatpush.bf16.xpose.msra.mxu0 %v367
      %378 = vmatpush.bf16.xpose.msra.mxu0 %v364
      %379 = vmatpush.bf16.xpose.msra.mxu0 %v361
      %380 = vmatmul.bf16.gmra.mxu0 %v358
      %v381 = vpop.f32.mrf.mxu0
      %v382 = vadd.f32 %v334, %v381
      %v383 = vpop.f32.mrf.mxu0
      %384 = vdwg.mxu0
      %vm385 = vcmask 523264
      %v386 = vsel %vm385, %v382, 0.0
      %387 = vadd.xlane.f32.xlu0 %v386
      %v388 = vpop.xlane.xlu0 %387
      %v389 = vmul.f32 %v388, 0.015625
      %v390 = vmul.f32 %v382, %v382
      %v391 = vsel %vm385, %v390, 0.0
      %392 = vadd.xlane.f32.xlu0 %v391
      %v393 = vpop.xlane.xlu0 %392
      %v394 = vmul.f32 %v393, 0.015625
      %v395 = vmul.f32 %v389, %v389
      %v396 = vsub.f32 %v394, %v395
      %v397 = vld [vmem:[%s255] sm:$0xff]
      %v398 = vadd.f32 %v396, 1e-05
      %v399 = vrsqrt.pop %v398
      %v400 = vmul.f32 %v399, %v398
      %v401 = vmul.f32 %v400, %v399
      %v402 = vmul.f32 0.5, %v401
      %v403 = vsub.f32 1.5, %v402
      %v404 = vmul.f32 %v399, %v403
      %vm405 = vweird.f32 %v398
      %vm406 = vweird.f32 %v399
      %vm407 = vmor %vm405, %vm406
      %v408 = vsel %vm407, %v399, %v404
      %v409 = vmul.f32 %v397, %v408
      %v410 = vld [vmem:[%s259] sm:$0xff]
      %v411 = vmul.f32 %v389, %v409
      %v412 = vsub.f32 %v410, %v411
      %414 = vset.pattern.permute.xlu0 0
      %415 = vperm.xlu0 %414, %v409
      %v416 = vpop.permute.xlu0 %415
      %v418 = vmul.f32 %v382, %v416
      %420 = vset.pattern.permute.xlu0 0
      %421 = vperm.xlu0 %420, %v412
      %v422 = vpop.permute.xlu0 %421
      %v424 = vadd.f32 %v418, %v422
      %v425 = vxor.u32 %v424, 2147483648
      %v426 = vmul.f32 %v425, 1.442695
      %v427 = vpow.pop %v426
      %v428 = vadd.f32 %v427, 1.0
      %v429 = vrcp.pop %v428
      %v430 = vmul.f32 %v428, %v429
      %v431 = vsub.f32 1.0, %v430
      %v432 = vmul.f32 %v429, %v431
      %v433 = vadd.f32 %v429, %v432
      %vm434 = vweird.f32 %v428
      %vm435 = vweird.f32 %v429
      %vm436 = vmor %vm434, %vm435
      %v437 = vsel %vm436, %v429, %v433
      %v438 = vand.u32 2147483647, %v428
      %vm439 = vcmp.eq.f32.partialorder %v438, 8.507059e+37
      %v440 = vand.u32 %v428, 2147483648
      %v441 = vor.u32 1.1754944e-38, %v440
      %v442 = vsel %vm439, %v441, %v437
      %v443 = vmul.f32 1.0, %v442
      %v444 = vmul.f32 %v424, %v443
      %v445 = vpack.c.bf16 %v444, %v444
      %vm446 = vcmask 519168
      %447 = vst.msk [vmem:[%s266] sm:$0xf] %vm446, %v445
      %p448 = scmp.lt.s32.totalorder %s19, 1
      %s449 = scalar_select %p448, %s19, 1
      %p450 = scmp.lt.s32.totalorder %s20, 0
      %s451 = scalar_select %p450, %s20, 0
      %s452 = sadd.s32 %s451, %s449
      %s453 = smul.addr %s452, 4
      %s454 = scalar_lea.vmem %s4, %s453
      // Predicated region
      $region37: #{down_conv_block.1} parent=35 // pred_check
        %p455 = pneg %p151
      $region38: #{down_conv_block.1} parent=35 // pred_check_branch
        %457 = sbr.rel (%p455) target = $region40
      $region39: #{down_conv_block.1} parent=35 // pred_region
        _
      $region40: #{down_conv_block.1} parent=35 // pred_fallthru
        _
    $region36: #{down_conv_block.1} parent=5 // pred_fallthru
      _
    %p458 = scmp.le.s32.totalorder 2, %s10
    // Predicated region
    $region41: #{down_conv_block.1} parent=5 // pred_check
      %p459 = pneg %p458
    $region42: #{down_conv_block.1} parent=5 // pred_check_branch
      %461 = sbr.rel (%p459) target = $region44
    $region43: #{down_conv_block.1} parent=5 // pred_region
      %s462 = ssub.s32 %s10, 2
      // Predicated region
      $region45: #{down_conv_block.1} parent=43 // pred_check
        %p463 = pneg %p157
      $region46: #{down_conv_block.1} parent=43 // pred_check_branch
        %465 = sbr.rel (%p463) target = $region48
      $region47: #{down_conv_block.1} parent=43 // pred_region
        %p466 = scmp.lt.s32.totalorder %s21, 1
        %s467 = scalar_select %p466, %s21, 1
        %p468 = scmp.lt.s32.totalorder %s22, 0
        %s469 = scalar_select %p468, %s22, 0
        %s470 = sadd.s32 %s469, %s467
        %s471 = smul.addr %s470, 4
        %s472 = scalar_lea.vmem %s4, %s471
      $region48: #{down_conv_block.1} parent=43 // pred_fallthru
        _
    $region44: #{down_conv_block.1} parent=5 // pred_fallthru
      _
  $region6: #{down_conv_block.1} parent=0 // loop_footer
    %s14 = sadd.s32 1, %s10
  $region7: #{down_conv_block.1} parent=0 // loop_footer_branch
    %9 = sbr.rel target = $region3
  $region8: #{down_conv_block.1} parent=0 // loop_exit
    _

</llo_original>
